<compile_context>
chip_gen: v5e
topology: v5e:2x2
jax: 0.10.0
libtpu: 0.0.40
codegen_flags: <defaults>
</compile_context>

<pallas_src>
import math

import jax
import jax.numpy as jnp
from jax import lax
from jax.experimental import pallas as pl
from jax.experimental.pallas import tpu as pltpu

_INV_SQRT2 = 1.0 / math.sqrt(2.0)


def mlp_trfmr_kernel(x_ref, w1_ref, b1_ref, w2_ref, b2_ref, o_ref, acc_ref):
    # x_ref:  (tm, D)  input row tile (caller dtype, cast to bf16 in-kernel)
    # w1_ref: (D, tH)  bf16 linear_in weight H-slice
    # b1_ref: (1, tH)  f32 bias H-slice
    # w2_ref: (tH, D)  bf16 linear_out weight H-slice
    # b2_ref: (1, D)   f32 bias (resident)
    # o_ref:  (tm, D)  output row tile
    # acc_ref:(tm, D)  f32 accumulator scratch (persists across the H axis)
    h_step = pl.program_id(1)

    @pl.when(h_step == 0)
    def _():
        acc_ref[...] = jnp.zeros_like(acc_ref)

    # In-kernel cast to bf16 (avoids a separate wrapper-side XLA cast pass).
    x = x_ref[...].astype(jnp.bfloat16)

    # linear_in for this H-slice: bf16 x bf16 -> fp32 accumulate on the MXU.
    h = jnp.dot(x, w1_ref[...], preferred_element_type=jnp.float32) + b1_ref[...]

    # Exact GELU in fp32 (matches torch.nn.GELU default): 0.5*x*(1+erf(x/sqrt(2)))
    h = 0.5 * h * (1.0 + lax.erf(h * jnp.float32(_INV_SQRT2)))

    # linear_out partial product for this H-slice, accumulated in fp32.
    acc_ref[...] += jnp.dot(h.astype(jnp.bfloat16), w2_ref[...],
                            preferred_element_type=jnp.float32)

    @pl.when(h_step == pl.num_programs(1) - 1)
    def _():
        # dropout with p=0.0 is the identity in train/eval alike.
        # TODO(synk): add a pltpu.prng_seed/prng_random_bits dropout mask if p > 0.
        o_ref[...] = (acc_ref[...] + b2_ref[...]).astype(o_ref.dtype)


def _round_up(x, m):
    return ((x + m - 1) // m) * m


def _vmem_budget_bytes():
    """Physical VMEM minus headroom for compiler scratch / semaphores."""
    try:
        cap = pltpu.get_tpu_info().vmem_capacity_bytes
    except Exception:
        cap = 64 << 20  # conservative per-TC fallback (v7x)
    return max(16 << 20, cap - (16 << 20))


def _vmem_need_bytes(tm, th, D, x_itemsize, out_itemsize, n_h):
    wbuf = 1 if n_h == 1 else 2                 # resident vs streamed (double-buffered)
    weights = wbuf * 2 * (D * th) * 2           # W1 (D,tH) + W2 (tH,D), bf16
    biases = wbuf * th * 4 + D * 4
    x_tiles = 2 * tm * D * x_itemsize           # double-buffered input row tiles
    o_tiles = 2 * tm * D * out_itemsize
    acc = tm * D * 4                            # fp32 accumulator scratch
    inter = tm * th * (4 + 2)                   # fp32 GELU intermediate + bf16 recast
    return weights + biases + x_tiles + o_tiles + acc + inter


def _choose_tiles(M, D, H, tm_req, x_itemsize, out_itemsize, budget):
    # Row tile: at most tm_req, 8-aligned, never larger than the row count.
    tm = min(_round_up(tm_req, 8), _round_up(M, 8))
    # Guarantee >= 2 row steps when there is enough work so v7x's 2 TCs both run.
    if M > 8 and pl.cdiv(M, tm) < 2:
        tm = _round_up(pl.cdiv(M, 2), 8)

    # H-tile candidates: full H (weights resident), else divisors of H that are
    # multiples of 128, descending (weight streaming).
    cands = [H] + [d for d in range(H - 128, 0, -128) if H % d == 0]
    th = cands[-1]
    for c in cands:
        if 1.3 * _vmem_need_bytes(tm, c, D, x_itemsize, out_itemsize, H // c) <= budget:
            th = c
            break
    # If even the smallest H tile does not fit, shrink the row tile.
    while tm > 8 and 1.3 * _vmem_need_bytes(tm, th, D, x_itemsize, out_itemsize,
                                            H // th) > budget:
        tm = max(8, _round_up(tm // 2, 8))
    return tm, th


def _spec(shape, index_map, resident):
    if resident:
        return pl.BlockSpec(shape, index_map, pipeline_mode=pl.Buffered(1))
    return pl.BlockSpec(shape, index_map)


def mlp_trfmr(x, w1, b1, w2, b2, *, tm=256, out_dtype=None):
    """x: (B, S, D). w1: (D, H), b1: (H,), w2: (H, D), b2: (D,)."""
    B, S, D = x.shape
    H = w1.shape[1]
    M = B * S
    out_dtype = x.dtype if out_dtype is None else jnp.dtype(out_dtype)
    out_itemsize = jnp.dtype(out_dtype).itemsize
    x_itemsize = jnp.dtype(x.dtype).itemsize

    budget = _vmem_budget_bytes()
    tm_eff, th = _choose_tiles(M, D, H, tm, x_itemsize, out_itemsize, budget)
    n_h = H // th
    Mp = pl.cdiv(M, tm_eff) * tm_eff  # pad ragged remainder instead of asserting

    x2d = x.reshape(M, D)
    if Mp != M:
        x2d = jnp.pad(x2d, ((0, Mp - M), (0, 0)))

    w1b = w1.astype(jnp.bfloat16)
    w2b = w2.astype(jnp.bfloat16)
    b1r = b1.reshape(1, H).astype(jnp.float32)
    b2r = b2.reshape(1, D).astype(jnp.float32)

    need = _vmem_need_bytes(tm_eff, th, D, x_itemsize, out_itemsize, n_h)
    vmem_limit = int(min(budget, max(32 << 20, int(1.3 * need) + (8 << 20))))

    resident = (n_h == 1)
    cost = pl.CostEstimate(
        flops=4 * M * D * H,
        transcendentals=M * H,
        bytes_accessed=(M * D * x_itemsize + 2 * D * H * 2 + (H + D) * 4
                        + M * D * out_itemsize),
    )

    out2d = pl.pallas_call(
        mlp_trfmr_kernel,
        out_shape=jax.ShapeDtypeStruct((Mp, D), out_dtype),
        grid_spec=pltpu.PrefetchScalarGridSpec(
            num_scalar_prefetch=0,
            grid=(Mp // tm_eff, n_h),
            in_specs=[
                pl.BlockSpec((tm_eff, D), lambda i, h: (i, 0)),        # x row tile
                _spec((D, th), lambda i, h: (0, h), resident),         # W1 H-slice
                _spec((1, th), lambda i, h: (0, h), resident),         # b1 H-slice
                _spec((th, D), lambda i, h: (h, 0), resident),         # W2 H-slice
                _spec((1, D), lambda i, h: (0, 0), True),              # b2 resident
            ],
            out_specs=pl.BlockSpec((tm_eff, D), lambda i, h: (i, 0)),
            scratch_shapes=[pltpu.VMEM((tm_eff, D), jnp.float32)],
        ),
        compiler_params=pltpu.CompilerParams(
            dimension_semantics=("parallel", "arbitrary"),
            vmem_limit_bytes=vmem_limit,
        ),
        cost_estimate=cost,
    )(x2d, w1b, b1r, w2b, b2r)

    return out2d[:M].reshape(B, S, D)


def reference_mlp(x, w1, b1, w2, b2):
    h = jnp.dot(x, w1) + b1
    h = 0.5 * h * (1.0 + lax.erf(h / jnp.sqrt(2.0)))
    return jnp.dot(h, w2) + b2


if __name__ == "__main__":
    # Shapes implied by the module: tokens with in_feats features,
    # hidden = hidden_ratio * in_feats = 4 * in_feats.
    B, S, IN_FEATS = 2, 8, 32
    HIDDEN = 4 * IN_FEATS  # 128

    key = jax.random.PRNGKey(0)
    kx, k1, k2, k3, k4 = jax.random.split(key, 5)

    x = jax.random.normal(kx, (B, S, IN_FEATS), dtype=jnp.float32)

    # Deterministic parameter init (PyTorch nn.Linear-style uniform bounds),
    # stored pre-transposed as (in, out).
    bound1 = 1.0 / math.sqrt(IN_FEATS)
    w1 = jax.random.uniform(k1, (IN_FEATS, HIDDEN), jnp.float32, -bound1, bound1)
    b1 = jax.random.uniform(k2, (HIDDEN,), jnp.float32, -bound1, bound1)
    bound2 = 1.0 / math.sqrt(HIDDEN)
    w2 = jax.random.uniform(k3, (HIDDEN, IN_FEATS), jnp.float32, -bound2, bound2)
    b2 = jax.random.uniform(k4, (IN_FEATS,), jnp.float32, -bound2, bound2)

    out = mlp_trfmr(x, w1, b1, w2, b2)
    out = jax.block_until_ready(out)

    ref = reference_mlp(x, w1, b1, w2, b2)
    assert out.shape == (B, S, IN_FEATS)
    # bf16 matmuls with fp32 accumulation -> loosened tolerance vs fp32 reference
    assert jnp.allclose(out, ref, atol=5e-2, rtol=5e-2), "mismatch vs reference"

    print("KERNEL_OK")
</pallas_src>

<mosaic_0001>
module attributes {stable_mosaic.version = 11 : i64} {
  func.func @mlp_trfmr_kernel(%arg0: i32, %arg1: i32, %arg2: memref<8x32xf32, #tpu.memory_space<vmem>>, %arg3: memref<32x128xbf16, #tpu.memory_space<vmem>>, %arg4: memref<1x128xf32, #tpu.memory_space<vmem>>, %arg5: memref<128x32xbf16, #tpu.memory_space<vmem>>, %arg6: memref<1x32xf32, #tpu.memory_space<vmem>>, %arg7: memref<8x32xf32, #tpu.memory_space<vmem>>, %arg8: memref<8x32xf32, #tpu.memory_space<vmem>>) attributes {dimension_semantics = [#tpu.dimension_semantics<parallel>, #tpu.dimension_semantics<arbitrary>], iteration_bounds = array<i64: 2, 1>, scalar_prefetch = 0 : i64, scratch_operands = 1 : i64, tpu.core_type = #tpu.core_type<tc>, window_params = [{transform_indices = @transform_0, window_bounds = array<i64: 8, 32>}, {pipeline_mode = #tpu.pipeline_mode<synchronous>, transform_indices = @transform_1, window_bounds = array<i64: 32, 128>}, {pipeline_mode = #tpu.pipeline_mode<synchronous>, transform_indices = @transform_2, window_bounds = array<i64: 1, 128>}, {pipeline_mode = #tpu.pipeline_mode<synchronous>, transform_indices = @transform_3, window_bounds = array<i64: 128, 32>}, {pipeline_mode = #tpu.pipeline_mode<synchronous>, transform_indices = @transform_4, window_bounds = array<i64: 1, 32>}, {transform_indices = @transform_5, window_bounds = array<i64: 8, 32>}]} {
    %c0_i32 = arith.constant 0 : i32
    %0 = arith.cmpi eq, %arg1, %c0_i32 : i32
    %1 = arith.extui %0 : i1 to i32
    %c0_i32_0 = arith.constant 0 : i32
    %2 = arith.cmpi ne, %1, %c0_i32_0 : i32
    scf.if %2 {
      %cst_18 = arith.constant 0.000000e+00 : f32
      %27 = vector.broadcast %cst_18 : f32 to vector<8x32xf32>
      %c0_19 = arith.constant 0 : index
      %c0_20 = arith.constant 0 : index
      %28 = vector.load %arg8[%c0_19, %c0_20] : memref<8x32xf32, #tpu.memory_space<vmem>>, vector<8x32xf32>
      tpu.vector_store %arg8[%c0_19, %c0_20], %27 {strides = array<i32>} : memref<8x32xf32, #tpu.memory_space<vmem>>, vector<8x32xf32>,
    } else {
    }
    %c0 = arith.constant 0 : index
    %c0_1 = arith.constant 0 : index
    %3 = vector.load %arg2[%c0, %c0_1] : memref<8x32xf32, #tpu.memory_space<vmem>>, vector<8x32xf32>
    %4 = arith.truncf %3 : vector<8x32xf32> to vector<8x32xbf16>
    %c0_2 = arith.constant 0 : index
    %c0_3 = arith.constant 0 : index
    %5 = vector.load %arg3[%c0_2, %c0_3] : memref<32x128xbf16, #tpu.memory_space<vmem>>, vector<32x128xbf16>
    %cst = arith.constant dense<0.000000e+00> : vector<8x128xf32>
    %6 = tpu.matmul %4, %5, %cst {dimension_numbers = #tpu.dot_dimension_numbers<[1], [0], [0], [1], [0, 0, 1, 1], [], []>} : vector<8x32xbf16>, vector<32x128xbf16>, vector<8x128xf32> -> vector<8x128xf32>
    %c0_4 = arith.constant 0 : index
    %c0_5 = arith.constant 0 : index
    %7 = vector.load %arg4[%c0_4, %c0_5] : memref<1x128xf32, #tpu.memory_space<vmem>>, vector<1x128xf32>
    %8 = vector.broadcast %7 : vector<1x128xf32> to vector<8x128xf32>
    %9 = arith.addf %6, %8 : vector<8x128xf32>
    %cst_6 = arith.constant 5.000000e-01 : f32
    %10 = vector.broadcast %cst_6 : f32 to vector<8x128xf32>
    %11 = arith.mulf %10, %9 : vector<8x128xf32>
    %cst_7 = arith.constant 0.707106769 : f32
    %12 = vector.broadcast %cst_7 : f32 to vector<8x128xf32>
    %13 = arith.mulf %9, %12 : vector<8x128xf32>
    %14 = math.erf %13 : vector<8x128xf32>
    %cst_8 = arith.constant 1.000000e+00 : f32
    %15 = vector.broadcast %cst_8 : f32 to vector<8x128xf32>
    %16 = arith.addf %15, %14 : vector<8x128xf32>
    %17 = arith.mulf %11, %16 : vector<8x128xf32>
    %c0_9 = arith.constant 0 : index
    %c0_10 = arith.constant 0 : index
    %18 = vector.load %arg8[%c0_9, %c0_10] : memref<8x32xf32, #tpu.memory_space<vmem>>, vector<8x32xf32>
    %19 = arith.truncf %17 : vector<8x128xf32> to vector<8x128xbf16>
    %c0_11 = arith.constant 0 : index
    %c0_12 = arith.constant 0 : index
    %20 = vector.load %arg5[%c0_11, %c0_12] : memref<128x32xbf16, #tpu.memory_space<vmem>>, vector<128x32xbf16>
    %cst_13 = arith.constant dense<0.000000e+00> : vector<8x32xf32>
    %21 = tpu.matmul %19, %20, %cst_13 {dimension_numbers = #tpu.dot_dimension_numbers<[1], [0], [0], [1], [0, 0, 1, 1], [], []>} : vector<8x128xbf16>, vector<128x32xbf16>, vector<8x32xf32> -> vector<8x32xf32>
    %22 = arith.addf %18, %21 : vector<8x32xf32>
    %c0_14 = arith.constant 0 : index
    %c0_15 = arith.constant 0 : index
    %23 = vector.load %arg8[%c0_14, %c0_15] : memref<8x32xf32, #tpu.memory_space<vmem>>, vector<8x32xf32>
    tpu.vector_store %arg8[%c0_14, %c0_15], %22 {strides = array<i32>} : memref<8x32xf32, #tpu.memory_space<vmem>>, vector<8x32xf32>,
    %c0_i32_16 = arith.constant 0 : i32
    %24 = arith.cmpi eq, %arg1, %c0_i32_16 : i32
    %25 = arith.extui %24 : i1 to i32
    %c0_i32_17 = arith.constant 0 : i32
    %26 = arith.cmpi ne, %25, %c0_i32_17 : i32
    scf.if %26 {
      %c0_18 = arith.constant 0 : index
      %c0_19 = arith.constant 0 : index
      %27 = vector.load %arg8[%c0_18, %c0_19] : memref<8x32xf32, #tpu.memory_space<vmem>>, vector<8x32xf32>
      %c0_20 = arith.constant 0 : index
      %c0_21 = arith.constant 0 : index
      %28 = vector.load %arg6[%c0_20, %c0_21] : memref<1x32xf32, #tpu.memory_space<vmem>>, vector<1x32xf32>
      %29 = vector.broadcast %28 : vector<1x32xf32> to vector<8x32xf32>
      %30 = arith.addf %27, %29 : vector<8x32xf32>
      %c0_22 = arith.constant 0 : index
      %c0_23 = arith.constant 0 : index
      %31 = vector.load %arg7[%c0_22, %c0_23] : memref<8x32xf32, #tpu.memory_space<vmem>>, vector<8x32xf32>
      tpu.vector_store %arg7[%c0_22, %c0_23], %30 {strides = array<i32>} : memref<8x32xf32, #tpu.memory_space<vmem>>, vector<8x32xf32>,
    } else {
    }
    return
  }
  func.func @transform_0(%arg0: i32, %arg1: i32) -> (i32, i32) {
    %c0_i32 = arith.constant 0 : i32
    %c0_i32_0 = arith.constant 0 : i32
    return %arg0, %c0_i32 : i32, i32
  }
  func.func @transform_1(%arg0: i32, %arg1: i32) -> (i32, i32) {
    %c0_i32 = arith.constant 0 : i32
    %c0_i32_0 = arith.constant 0 : i32
    return %c0_i32, %arg1 : i32, i32
  }
  func.func @transform_2(%arg0: i32, %arg1: i32) -> (i32, i32) {
    %c0_i32 = arith.constant 0 : i32
    %c0_i32_0 = arith.constant 0 : i32
    return %c0_i32, %arg1 : i32, i32
  }
  func.func @transform_3(%arg0: i32, %arg1: i32) -> (i32, i32) {
    %c0_i32 = arith.constant 0 : i32
    %c0_i32_0 = arith.constant 0 : i32
    return %arg1, %c0_i32 : i32, i32
  }
  func.func @transform_4(%arg0: i32, %arg1: i32) -> (i32, i32) {
    %c0_i32 = arith.constant 0 : i32
    %c0_i32_0 = arith.constant 0 : i32
    %c0_i32_1 = arith.constant 0 : i32
    return %c0_i32, %c0_i32_0 : i32, i32
  }
  func.func @transform_5(%arg0: i32, %arg1: i32) -> (i32, i32) {
    %c0_i32 = arith.constant 0 : i32
    %c0_i32_0 = arith.constant 0 : i32
    return %arg0, %c0_i32 : i32, i32
  }
}

</mosaic_0001>

<llo_original>
// kernel: tpu_custom_call.1
$region0: #{tpu_custom_call.1}
  #allocation0 [shape = 'u32[]', space=smem, size = 0x4, offset = 0x4, fixed_abs, tag = 'smem constant byte address 0x4 - core index']
  #allocation1 [shape = 'u32[72,128]{1,0:T(1,128)}', space=vmem, size = 0x9000, scoped, tag = 'internal scratch']
  #allocation2 [shape = 'f32[8,32]{1,0:T(8,128)}', space=vmem, size = 0x1000, scoped, tag = 'scratch operand']
  %s0 = inlined_call_operand.vmem [shape: f32[16,32], index: 0, kind: input, shape index: {}]
  %s1 = inlined_call_operand.vmem [shape: bf16[32,128], index: 1, kind: input, shape index: {}]
  %s2 = inlined_call_operand.vmem [shape: f32[1,128], index: 2, kind: input, shape index: {}]
  %s3 = inlined_call_operand.vmem [shape: bf16[128,32], index: 3, kind: input, shape index: {}]
  %s4 = inlined_call_operand.vmem [shape: f32[1,32], index: 4, kind: input, shape index: {}]
  %s5 = inlined_call_operand.hbm [shape: f32[16,32], index: 5, kind: output, shape index: {}]
  %s6 = sld [smem:[#allocation0]]
  $region61: #{tpu_custom_call.1} parent=0
    _
  %s8 = ssub.s32 1, %s6
  %s9 = scalar_select 0, %s8, %s6
  $region1: #{tpu_custom_call.1} parent=0
    #allocation3 [shape = 'u8[8192]{0}', space=vmem, size = 0x2000, scoped, tag = 'output window, operand 0']
    #allocation4 [shape = 's32[2]{0}', space=sflag, size = 0x8, scoped, tag = 'scoped memory for tpu_custom_call.1']
    %10 = vsyncpa [#allocation4], 0
    %s11 = scalar_lea.sflag [#allocation4], 1
    %12 = vsyncpa %s11, 0
    loop: start=0, step=1, limit=4
    $region2: #{tpu_custom_call.1} parent=1 // loop_pre_header
      _
    $region3: #{tpu_custom_call.1} parent=1 // loop_header
      %s14 = sphi 0, %s18
      %p15 = scmp.ge.s32.totalorder %s14, 4
      %s21 = sphi 0, %s33
      %s22 = sphi 0, %s29
      %s23 = sphi 0, %s21
      %s24 = sphi 0, %s22
      %s25 = sphi 0, %s23
      %s26 = sphi 0, %s24
      %s36 = sphi 0, %s38
      %s39 = sphi 0, %s36
      %s40 = sphi 0, %s39
      %s56 = sphi 0, %s40
      %s62 = sphi 0, %s64
      %s65 = sphi 0, %s62
      %s66 = sphi 0, %s65
      %s82 = sphi 0, %s66
      %s88 = sphi 0, %s90
      %s91 = sphi 0, %s88
      %s92 = sphi 0, %s91
      %s108 = sphi 0, %s92
      %s114 = sphi 0, %s116
      %s117 = sphi 0, %s114
      %s118 = sphi 0, %s117
      %s134 = sphi 0, %s118
      %s138 = sphi 0, %s138
      %s140 = sphi 0, %s138
      %s141 = sphi 0, %s140
      %s155 = sphi 0, %s141
      %s161 = sphi 0, %s163
      %s164 = sphi 0, %s161
      %s165 = sphi 0, %s164
      %s181 = sphi 0, %s165
    $region4: #{tpu_custom_call.1} parent=1 // loop_header_branch
      %17 = sbr.rel (%p15) target = $region8
    $region5: #{tpu_custom_call.1} parent=1 // loop_body
      %s19 = ssub.s32 %s14, 1
      %s20 = ssub.s32 %s14, 2
      %s27 = sadd.s32 1, %s22
      %p28 = scmp.ge.s32.totalorder %s27, 1
      %s29 = scalar_select %p28, 0, %s27
      %s30 = sadd.s32 1, %s21
      %s31 = scalar_select %p28, %s30, %s21
      %p32 = scmp.ge.s32.totalorder %s31, 2
      %s33 = scalar_select %p32, 0, %s31
      %s34 = ssub.s32 %s21, %s33
      %p35 = scmp.eq.s32.totalorder %s34, 0
      %s37 = sadd.s32 %s36, 1
      %s38 = scalar_select %p35, %s36, %s37
      %p41 = pneg %p35
      %p42 = scmp.eq.s32.totalorder %s14, 1
      %p43 = por %p41, %p42
      %p44 = scmp.ne.s32.totalorder %s36, %s39
      %p45 = scmp.eq.s32.totalorder %s14, 0
      %p46 = por %p44, %p45
      %p47 = scmp.ne.s32.totalorder %s36, %s39
      %p48 = scmp.eq.s32.totalorder %s19, 1
      %p49 = por %p47, %p48
      %p50 = scmp.ne.s32.totalorder %s39, %s40
      %p51 = scmp.eq.s32.totalorder %s19, 0
      %p52 = por %p50, %p51
      %p53 = scmp.ne.s32.totalorder %s39, %s40
      %p54 = scmp.eq.s32.totalorder %s20, 1
      %p55 = por %p53, %p54
      %p57 = scmp.ne.s32.totalorder %s40, %s56
      %p58 = scmp.eq.s32.totalorder %s20, 0
      %p59 = por %p57, %p58
      %s60 = ssub.s32 %s22, %s29
      %p61 = scmp.eq.s32.totalorder %s60, 0
      %s63 = sadd.s32 %s62, 1
      %s64 = scalar_select %p61, %s62, %s63
      %p67 = pneg %p61
      %p68 = scmp.eq.s32.totalorder %s14, 1
      %p69 = por %p67, %p68
      %p70 = scmp.ne.s32.totalorder %s62, %s65
      %p71 = scmp.eq.s32.totalorder %s14, 0
      %p72 = por %p70, %p71
      %p73 = scmp.ne.s32.totalorder %s62, %s65
      %p74 = scmp.eq.s32.totalorder %s19, 1
      %p75 = por %p73, %p74
      %p76 = scmp.ne.s32.totalorder %s65, %s66
      %p77 = scmp.eq.s32.totalorder %s19, 0
      %p78 = por %p76, %p77
      %p79 = scmp.ne.s32.totalorder %s65, %s66
      %p80 = scmp.eq.s32.totalorder %s20, 1
      %p81 = por %p79, %p80
      %p83 = scmp.ne.s32.totalorder %s66, %s82
      %p84 = scmp.eq.s32.totalorder %s20, 0
      %p85 = por %p83, %p84
      %s86 = ssub.s32 %s22, %s29
      %p87 = scmp.eq.s32.totalorder %s86, 0
      %s89 = sadd.s32 %s88, 1
      %s90 = scalar_select %p87, %s88, %s89
      %p93 = pneg %p87
      %p94 = scmp.eq.s32.totalorder %s14, 1
      %p95 = por %p93, %p94
      %p96 = scmp.ne.s32.totalorder %s88, %s91
      %p97 = scmp.eq.s32.totalorder %s14, 0
      %p98 = por %p96, %p97
      %p99 = scmp.ne.s32.totalorder %s88, %s91
      %p100 = scmp.eq.s32.totalorder %s19, 1
      %p101 = por %p99, %p100
      %p102 = scmp.ne.s32.totalorder %s91, %s92
      %p103 = scmp.eq.s32.totalorder %s19, 0
      %p104 = por %p102, %p103
      %p105 = scmp.ne.s32.totalorder %s91, %s92
      %p106 = scmp.eq.s32.totalorder %s20, 1
      %p107 = por %p105, %p106
      %p109 = scmp.ne.s32.totalorder %s92, %s108
      %p110 = scmp.eq.s32.totalorder %s20, 0
      %p111 = por %p109, %p110
      %s112 = ssub.s32 %s22, %s29
      %p113 = scmp.eq.s32.totalorder %s112, 0
      %s115 = sadd.s32 %s114, 1
      %s116 = scalar_select %p113, %s114, %s115
      %p119 = pneg %p113
      %p120 = scmp.eq.s32.totalorder %s14, 1
      %p121 = por %p119, %p120
      %p122 = scmp.ne.s32.totalorder %s114, %s117
      %p123 = scmp.eq.s32.totalorder %s14, 0
      %p124 = por %p122, %p123
      %p125 = scmp.ne.s32.totalorder %s114, %s117
      %p126 = scmp.eq.s32.totalorder %s19, 1
      %p127 = por %p125, %p126
      %p128 = scmp.ne.s32.totalorder %s117, %s118
      %p129 = scmp.eq.s32.totalorder %s19, 0
      %p130 = por %p128, %p129
      %p131 = scmp.ne.s32.totalorder %s117, %s118
      %p132 = scmp.eq.s32.totalorder %s20, 1
      %p133 = por %p131, %p132
      %p135 = scmp.ne.s32.totalorder %s118, %s134
      %p136 = scmp.eq.s32.totalorder %s20, 0
      %p137 = por %p135, %p136
      %s139 = sadd.s32 %s138, 1
      %p142 = scmp.eq.s32.totalorder %s14, 1
      %p143 = scmp.ne.s32.totalorder %s138, %s140
      %p144 = scmp.eq.s32.totalorder %s14, 0
      %p145 = por %p143, %p144
      %p146 = scmp.ne.s32.totalorder %s138, %s140
      %p147 = scmp.eq.s32.totalorder %s19, 1
      %p148 = por %p146, %p147
      %p149 = scmp.ne.s32.totalorder %s140, %s141
      %p150 = scmp.eq.s32.totalorder %s19, 0
      %p151 = por %p149, %p150
      %p152 = scmp.ne.s32.totalorder %s140, %s141
      %p153 = scmp.eq.s32.totalorder %s20, 1
      %p154 = por %p152, %p153
      %p156 = scmp.ne.s32.totalorder %s141, %s155
      %p157 = scmp.eq.s32.totalorder %s20, 0
      %p158 = por %p156, %p157
      %s159 = ssub.s32 %s21, %s33
      %p160 = scmp.eq.s32.totalorder %s159, 0
      %s162 = sadd.s32 %s161, 1
      %s163 = scalar_select %p160, %s161, %s162
      %p166 = pneg %p160
      %p167 = scmp.eq.s32.totalorder %s14, 1
      %p168 = por %p166, %p167
      %p169 = scmp.ne.s32.totalorder %s161, %s164
      %p170 = scmp.eq.s32.totalorder %s14, 0
      %p171 = por %p169, %p170
      %p172 = scmp.ne.s32.totalorder %s161, %s164
      %p173 = scmp.eq.s32.totalorder %s19, 1
      %p174 = por %p172, %p173
      %p175 = scmp.ne.s32.totalorder %s164, %s165
      %p176 = scmp.eq.s32.totalorder %s19, 0
      %p177 = por %p175, %p176
      %p178 = scmp.ne.s32.totalorder %s164, %s165
      %p179 = scmp.eq.s32.totalorder %s20, 1
      %p180 = por %p178, %p179
      %p182 = scmp.ne.s32.totalorder %s165, %s181
      %p183 = scmp.eq.s32.totalorder %s20, 0
      %p184 = por %p182, %p183
      %p185 = scmp.le.s32.totalorder 1, %s14
      %p186 = scmp.lt.s32.totalorder %s14, 3
      %p187 = pnand %p185, %p186
      %p188 = pneg %p187
      // Predicated region
      $region9: #{tpu_custom_call.1} parent=5 // pred_check
        _
      $region10: #{tpu_custom_call.1} parent=5 // pred_check_branch
        %190 = sbr.rel (%p187) target = $region12
      $region11: #{tpu_custom_call.1} parent=5 // pred_region
        %s191 = ssub.s32 %s14, 1
        // Predicated region
        $region13: #{tpu_custom_call.1} parent=11 // pred_check
          %p192 = pneg %p78
        $region14: #{tpu_custom_call.1} parent=11 // pred_check_branch
          %194 = sbr.rel (%p192) target = $region16
        $region15: #{tpu_custom_call.1} parent=11 // pred_region
          %p195 = scmp.lt.s32.totalorder %s24, 0
          %s196 = scalar_select %p195, %s24, 0
          %s197 = smul.addr %s196, 4
          %s198 = scalar_lea.vmem %s1, %s197
        $region16: #{tpu_custom_call.1} parent=11 // pred_fallthru
          _
        // Predicated region
        $region17: #{tpu_custom_call.1} parent=11 // pred_check
          %p199 = pneg %p104
        $region18: #{tpu_custom_call.1} parent=11 // pred_check_branch
          %201 = sbr.rel (%p199) target = $region20
        $region19: #{tpu_custom_call.1} parent=11 // pred_region
          %p202 = scmp.lt.s32.totalorder %s24, 0
          %s203 = scalar_select %p202, %s24, 0
          %s204 = scalar_lea.vmem %s2, %s203
        $region20: #{tpu_custom_call.1} parent=11 // pred_fallthru
          _
        // Predicated region
        $region21: #{tpu_custom_call.1} parent=11 // pred_check
          %p205 = pneg %p130
        $region22: #{tpu_custom_call.1} parent=11 // pred_check_branch
          %207 = sbr.rel (%p205) target = $region24
        $region23: #{tpu_custom_call.1} parent=11 // pred_region
          %s208 = smul.u32 16, %s24
          %p209 = scmp.lt.s32.totalorder %s208, 15
          %s210 = scalar_select %p209, %s208, 15
          %s211 = smul.addr %s210, 4
          %s212 = scalar_lea.vmem %s3, %s211
          %s213 = smul.u32 16, %s24
        $region24: #{tpu_custom_call.1} parent=11 // pred_fallthru
          _
        // Predicated region
        $region25: #{tpu_custom_call.1} parent=11 // pred_check
          %p214 = pneg %p151
        $region26: #{tpu_custom_call.1} parent=11 // pred_check_branch
          %216 = sbr.rel (%p214) target = $region28
        $region27: #{tpu_custom_call.1} parent=11 // pred_region
          _
        $region28: #{tpu_custom_call.1} parent=11 // pred_fallthru
          _
      $region12: #{tpu_custom_call.1} parent=5 // pred_fallthru
        _
      %p217 = scmp.lt.s32.totalorder %s14, 2
      // Predicated region
      $region29: #{tpu_custom_call.1} parent=5 // pred_check
        %p218 = pneg %p217
      $region30: #{tpu_custom_call.1} parent=5 // pred_check_branch
        %220 = sbr.rel (%p218) target = $region32
      $region31: #{tpu_custom_call.1} parent=5 // pred_region
        // Predicated region
        $region33: #{tpu_custom_call.1} parent=31 // pred_check
          %p221 = pneg %p46
        $region34: #{tpu_custom_call.1} parent=31 // pred_check_branch
          %223 = sbr.rel (%p221) target = $region36
        $region35: #{tpu_custom_call.1} parent=31 // pred_region
          %p224 = scmp.lt.s32.totalorder %s21, 1
          %s225 = scalar_select %p224, %s21, 1
          %s226 = smul.addr %s225, 8
          %s227 = scalar_lea.vmem %s0, %s226
        $region36: #{tpu_custom_call.1} parent=31 // pred_fallthru
          _
      $region32: #{tpu_custom_call.1} parent=5 // pred_fallthru
        _
      %p228 = scmp.le.s32.totalorder 1, %s14
      %p229 = scmp.lt.s32.totalorder %s14, 3
      %p230 = pnand %p228, %p229
      %p231 = pneg %p230
      // Predicated region
      $region37: #{tpu_custom_call.1} parent=5 // pred_check
        _
      $region38: #{tpu_custom_call.1} parent=5 // pred_check_branch
        %233 = sbr.rel (%p230) target = $region40
      $region39: #{tpu_custom_call.1} parent=5 // pred_region
        %s234 = ssub.s32 %s14, 1
        %p235 = scmp.lt.s32.totalorder %s23, 1
        %s236 = scalar_select %p235, %s23, 1
        %s237 = smul.addr %s236, 8
        %s238 = scalar_lea.vmem %s0, %s237
        %p239 = pneg %p52
        %p240 = pneg %p49
        %p241 = scmp.lt.s32.totalorder %s24, 0
        %s242 = scalar_select %p241, %s24, 0
        %s243 = smul.addr %s242, 4
        %s244 = scalar_lea.vmem %s1, %s243
        %p245 = pneg %p78
        %p246 = pneg %p75
        %p247 = scmp.lt.s32.totalorder %s24, 0
        %s248 = scalar_select %p247, %s24, 0
        %s249 = scalar_lea.vmem %s2, %s248
        %p250 = pneg %p104
        %p251 = pneg %p101
        %s252 = smul.u32 16, %s24
        %p253 = scmp.lt.s32.totalorder %s252, 15
        %s254 = scalar_select %p253, %s252, 15
        %s255 = smul.addr %s254, 4
        %s256 = scalar_lea.vmem %s3, %s255
        %p257 = pneg %p130
        %p258 = pneg %p127
        %p259 = pneg %p151
        %p260 = pneg %p148
        %p261 = pneg %p177
        %p262 = pneg %p174
        %s263 = sand.u32 %s164, 1
        %s264 = scalar_lea.sflag [#allocation4], %s263
        %s265 = sand.u32 %s164, 1
        %s266 = smul.addr %s265, 8
        %s267 = scalar_lea.vmem [#allocation3], %s266
        %p268 = scmp.lt.s32.totalorder %s23, 1
        %s269 = scalar_select %p268, %s23, 1
        %s270 = smul.addr %s269, 8
        %s271 = scalar_lea.vmem %s0, %s270
        %p272 = scmp.lt.s32.totalorder %s24, 0
        %s273 = scalar_select %p272, %s24, 0
        %s274 = smul.addr %s273, 4
        %s275 = scalar_lea.vmem %s1, %s274
        %p276 = scmp.lt.s32.totalorder %s24, 0
        %s277 = scalar_select %p276, %s24, 0
        %s278 = scalar_lea.vmem %s2, %s277
        %s279 = smul.u32 16, %s24
        %p280 = scmp.lt.s32.totalorder %s279, 15
        %s281 = scalar_select %p280, %s279, 15
        %s282 = smul.addr %s281, 4
        %s283 = scalar_lea.vmem %s3, %s282
        %s284 = smul.u32 16, %s24
        %p286 = scmp.eq.s32.totalorder %s24, 0
        // Predicated region
        $region41: #{tpu_custom_call.1} parent=39 // pred_check
          %p287 = pneg %p286
        $region42: #{tpu_custom_call.1} parent=39 // pred_check_branch
          %289 = sbr.rel (%p287) target = $region44
        $region43: #{tpu_custom_call.1} parent=39 // pred_region
          %vm290 = vcmask 261120
          %291 = vst.msk [vmem:[#allocation2] sm:$0xff] %vm290, 0.0
        $region44: #{tpu_custom_call.1} parent=39 // pred_fallthru
          _
        %v292 = vld [vmem:[%s271] sm:$0xff]
        %v293 = vpack.c.bf16 %v292, %v292
        %v294 = vld [vmem:[%s275] sm:$0xf]
        %v295 = vld [vmem:[%s275 + $0x4] sm:$0xf]
        %v296 = vld [vmem:[%s275 + $0x8] sm:$0xf]
        %v297 = vld [vmem:[%s275 + $0xc] sm:$0xf]
        %v298 = vld [vmem:[%s278] sm:$0x1]
        %v300 = vperm.slane %v298, 0
        %v306 = vunpack.c.l.b16 %v294
        %v307 = vunpack.c.l.b16 %v295
        %v308 = vunpack.c.l.b16 %v296
        %v309 = vunpack.c.l.b16 %v297
        %v310 = vpack.c.b16 %v307, %v306
        %v311 = vpack.c.b16 %v309, %v308
        %vm314 = vcmask 261120
        %v316 = vsel %vm314, %v293, 0
        %318 = vmatpush.bf16.msra.mxu0 0
        %319 = vmatpush.bf16.msra.mxu0 0
        %320 = vmatpush.bf16.msra.mxu0 0
        %321 = vmatpush.bf16.msra.mxu0 0
        %322 = vmatpush.bf16.msra.mxu0 0
        %323 = vmatpush.bf16.msra.mxu0 0
        %324 = vmatpush.bf16.msra.mxu0 %v311
        %325 = vmatpush.bf16.msra.mxu0 %v310
        %326 = vmatmul.bf16.gmra.mxu0 %v316
        %v327 = vpop.f32.mrf.mxu0
        %v328 = vadd.f32 %v300, %v327
        %v329 = vpop.f32.mrf.mxu0
        %330 = vdwg.mxu0
        %v331 = vmul.f32 %v328, 0.5
        %v332 = vmul.f32 %v328, 0.70710677
        %v333 = vmul.f32 %v332, %v332
        %v334 = vmin.f32 16.0, %v333
        %v335 = vmul.f32 %v334, 2.1237322e-06
        %v336 = vadd.f32 %v335, 0.00028619796
        %v337 = vmul.f32 %v334, %v336
        %v338 = vadd.f32 %v337, 0.0036580483
        %v339 = vmul.f32 %v334, %v338
        %v340 = vadd.f32 %v339, 0.05243302
        %v341 = vmul.f32 %v334, %v340
        %v342 = vadd.f32 %v341, 0.18741608
        %v343 = vmul.f32 %v334, %v342
        %v344 = vadd.f32 %v343, 1.1283791
        %v345 = vmul.f32 %v332, %v344
        %v346 = vmul.f32 %v334, 3.8918573e-05
        %v347 = vadd.f32 %v346, 0.001143296
        %v348 = vmul.f32 %v334, %v347
        %v349 = vadd.f32 %v348, 0.014752088
        %v350 = vmul.f32 %v334, %v349
        %v351 = vadd.f32 %v350, 0.112945676
        %v352 = vmul.f32 %v334, %v351
        %v353 = vadd.f32 %v352, 0.4994258
        %v354 = vmul.f32 %v334, %v353
        %v355 = vadd.f32 %v354, 1.0
        %v356 = vrcp.pop %v355
        %v357 = vmul.f32 %v355, %v356
        %v358 = vsub.f32 1.0, %v357
        %v359 = vmul.f32 %v356, %v358
        %v360 = vadd.f32 %v356, %v359
        %vm361 = vweird.f32 %v355
        %vm362 = vweird.f32 %v356
        %vm363 = vmor %vm361, %vm362
        %v364 = vsel %vm363, %v356, %v360
        %v365 = vand.u32 2147483647, %v355
        %vm366 = vcmp.eq.f32.partialorder %v365, 8.507059e+37
        %v367 = vand.u32 %v355, 2147483648
        %v368 = vor.u32 1.1754944e-38, %v367
        %v369 = vsel %vm366, %v368, %v364
        %v370 = vmul.f32 %v345, %v369
        %v371 = vmin.f32 %v370, 1.0
        %v372 = vmax.f32 %v371, -1.0
        %v373 = vadd.f32 %v372, 1.0
        %v374 = vmul.f32 %v331, %v373
        %v375 = vld [vmem:[#allocation2] sm:$0xff]
        %v376 = vpack.c.bf16 %v374, %v374
        %v377 = vld [vmem:[%s283] sm:$0xf]
        %v378 = vld [vmem:[%s283 + $0x4] sm:$0xf]
        %v379 = vld [vmem:[%s283 + $0x8] sm:$0xf]
        %v380 = vld [vmem:[%s283 + $0xc] sm:$0xf]
        %v381 = vld [vmem:[%s283 + $0x10] sm:$0xf]
        %v382 = vld [vmem:[%s283 + $0x14] sm:$0xf]
        %v383 = vld [vmem:[%s283 + $0x18] sm:$0xf]
        %v384 = vld [vmem:[%s283 + $0x1c] sm:$0xf]
        %v385 = vld [vmem:[%s283 + $0x20] sm:$0xf]
        %v386 = vld [vmem:[%s283 + $0x24] sm:$0xf]
        %v387 = vld [vmem:[%s283 + $0x28] sm:$0xf]
        %v388 = vld [vmem:[%s283 + $0x2c] sm:$0xf]
        %v389 = vld [vmem:[%s283 + $0x30] sm:$0xf]
        %v390 = vld [vmem:[%s283 + $0x34] sm:$0xf]
        %v391 = vld [vmem:[%s283 + $0x38] sm:$0xf]
        %v392 = vld [vmem:[%s283 + $0x3c] sm:$0xf]
        %v409 = vunpack.c.l.b16 %v377
        %v410 = vunpack.c.l.b16 %v378
        %v411 = vunpack.c.l.b16 %v379
        %v412 = vunpack.c.l.b16 %v380
        %v413 = vunpack.c.l.b16 %v381
        %v414 = vunpack.c.l.b16 %v382
        %v415 = vunpack.c.l.b16 %v383
        %v416 = vunpack.c.l.b16 %v384
        %v417 = vunpack.c.l.b16 %v385
        %v418 = vunpack.c.l.b16 %v386
        %v419 = vunpack.c.l.b16 %v387
        %v420 = vunpack.c.l.b16 %v388
        %v421 = vunpack.c.l.b16 %v389
        %v422 = vunpack.c.l.b16 %v390
        %v423 = vunpack.c.l.b16 %v391
        %v424 = vunpack.c.l.b16 %v392
        %v425 = vpack.c.b16 %v410, %v409
        %v426 = vpack.c.b16 %v412, %v411
        %v427 = vpack.c.b16 %v414, %v413
        %v428 = vpack.c.b16 %v416, %v415
        %v429 = vpack.c.b16 %v418, %v417
        %v430 = vpack.c.b16 %v420, %v419
        %v431 = vpack.c.b16 %v422, %v421
        %v432 = vpack.c.b16 %v424, %v423
        %441 = vmatpush.bf16.msra.mxu0 %v432
        %442 = vmatpush.bf16.msra.mxu0 %v431
        %443 = vmatpush.bf16.msra.mxu0 %v430
        %444 = vmatpush.bf16.msra.mxu0 %v429
        %445 = vmatpush.bf16.msra.mxu0 %v428
        %446 = vmatpush.bf16.msra.mxu0 %v427
        %447 = vmatpush.bf16.msra.mxu0 %v426
        %448 = vmatpush.bf16.msra.mxu0 %v425
        %449 = vmatmul.bf16.gmra.mxu0 %v376
        %v450 = vpop.f32.mrf.mxu0
        %v451 = vadd.f32 0.0, %v450
        %v452 = vpop.f32.mrf.mxu0
        %453 = vdwg.mxu0
        %v454 = vadd.f32 %v375, %v451
        %455 = vst.msk [vmem:[#allocation2] sm:$0xff] %vm314, %v454
        // Predicated region
        $region45: #{tpu_custom_call.1} parent=39 // pred_check
          %p456 = pneg %p286
        $region46: #{tpu_custom_call.1} parent=39 // pred_check_branch
          %458 = sbr.rel (%p456) target = $region48
        $region47: #{tpu_custom_call.1} parent=39 // pred_region
          %v459 = vld [vmem:[#allocation2] sm:$0xff]
          %v460 = vld [vmem:[%s4] sm:$0x1]
          %v462 = vperm.slane %v460, 0
          %v464 = vadd.f32 %v459, %v462
          %465 = vst.msk [vmem:[%s267] sm:$0xff] %vm314, %v464
        $region48: #{tpu_custom_call.1} parent=39 // pred_fallthru
          _
        %s466 = sand.u32 %s164, 1
        %s467 = scalar_lea.sflag [#allocation4], %s466
        %s468 = sand.u32 %s164, 1
        %s469 = smul.addr %s468, 8
        %s470 = scalar_lea.vmem [#allocation3], %s469
        // Predicated region
        $region49: #{tpu_custom_call.1} parent=39 // pred_check
          %p471 = pneg %p174
        $region50: #{tpu_custom_call.1} parent=39 // pred_check_branch
          %473 = sbr.rel (%p471) target = $region52
        $region51: #{tpu_custom_call.1} parent=39 // pred_region
          %475 = vsyncadd %s467, 0
          %s476 = smul.addr %s23, 8
          %s477 = scalar_lea.hbm %s5, %s476
          %s479 = sshll.u32 %s470, 4
          %s480 = int_to_ptr.vmem [resolvable:$true] %s479
          %s481 = sshll.u32 %s477, 4
          %s482 = int_to_ptr.hbm [resolvable:$true] %s481
          %484 = dma.vmem_to_hbm [thread:$0]  %s480, 128, %s482, %s467
        $region52: #{tpu_custom_call.1} parent=39 // pred_fallthru
          _
      $region40: #{tpu_custom_call.1} parent=5 // pred_fallthru
        _
      %p485 = scmp.le.s32.totalorder 2, %s14
      // Predicated region
      $region53: #{tpu_custom_call.1} parent=5 // pred_check
        %p486 = pneg %p485
      $region54: #{tpu_custom_call.1} parent=5 // pred_check_branch
        %488 = sbr.rel (%p486) target = $region56
      $region55: #{tpu_custom_call.1} parent=5 // pred_region
        %s489 = ssub.s32 %s14, 2
        // Predicated region
        $region57: #{tpu_custom_call.1} parent=55 // pred_check
          %p490 = pneg %p180
        $region58: #{tpu_custom_call.1} parent=55 // pred_check_branch
          %492 = sbr.rel (%p490) target = $region60
        $region59: #{tpu_custom_call.1} parent=55 // pred_region
          %s493 = sand.u32 %s165, 1
          %s494 = scalar_lea.sflag [#allocation4], %s493
          %s495 = sand.u32 %s165, 1
          %s496 = smul.addr %s495, 8
          %s497 = scalar_lea.vmem [#allocation3], %s496
          %499 = dma.done %s494, 128
        $region60: #{tpu_custom_call.1} parent=55 // pred_fallthru
          _
      $region56: #{tpu_custom_call.1} parent=5 // pred_fallthru
        _
    $region6: #{tpu_custom_call.1} parent=1 // loop_footer
      %s18 = sadd.s32 1, %s14
    $region7: #{tpu_custom_call.1} parent=1 // loop_footer_branch
      %13 = sbr.rel target = $region3
    $region8: #{tpu_custom_call.1} parent=1 // loop_exit
      _
    %500 = vsyncpa [#allocation4], 1
    %s501 = scalar_lea.sflag [#allocation4], 1
    %502 = vsyncpa %s501, 1

</llo_original>
